<compile_context>
chip_gen: v7x
topology: tpu7x:2x2x1
jax: 0.10.0
libtpu: 0.0.40
codegen_flags: <defaults>
</compile_context>

<pallas_src>
import functools

import jax
import jax.numpy as jnp
from jax import lax
from jax.experimental import pallas as pl
from jax.experimental.pallas import tpu as pltpu


def _round_up(x, m):
    return -(-x // m) * m


def _block_kernel(x_ref, w_ref, o_ref, taps_ref, *,
                  K, Wp, Wout, L_valid, L_pad, n_valid, use_act: bool, eps: float):
    # x_ref:    (1, Cin_p, Lx)        bf16 flattened reflect-padded image (zero tail)
    # w_ref:    (TC, K*K*Cin_p)       bf16 stacked-tap weight matrix
    # o_ref:    (1, TC, L_pad)        fused conv+norm+relu output
    # taps_ref: (K*K*Cin_p, L_pad)    bf16 VMEM scratch: stacked shifted slices
    xv = x_ref[0]                       # [Cin_p, Lx]
    cin_p = xv.shape[0]

    # Build the stacked-taps matrix: row block t = (di, dj) holds
    # xflat[:, di*Wp + dj : di*Wp + dj + L_pad].  Stores are sublane-aligned
    # (t*Cin_p multiple of 8) and lane-dense (full L_pad).
    for di in range(K):
        for dj in range(K):
            t = di * K + dj
            s = di * Wp + dj                                      # static lane offset
            taps_ref[pl.ds(t * cin_p, cin_p), :] = lax.slice(
                xv, (0, s), (cin_p, s + L_pad))

    # Single wide MXU contraction (bf16 operands, f32 accumulation).
    acc = jnp.dot(w_ref[...], taps_ref[...],
                  preferred_element_type=jnp.float32)              # [TC, L_pad]

    # Valid-column mask generated in-kernel: column c is a real output pixel iff
    # c < Hout*Wp and (c mod Wp) < Wout.
    col = lax.broadcasted_iota(jnp.int32, (1, L_pad), 1)
    mask = jnp.where((col % Wp < Wout) & (col < L_valid),
                     jnp.float32(1.0), jnp.float32(0.0))           # [1, L_pad]

    # Fused one-pass masked moments (saves ~2 full-tile VPU passes vs two-pass).
    inv_n = jnp.float32(1.0 / n_valid)
    am = acc * mask                                                # [TC, L_pad]
    m1 = jnp.sum(am, axis=1, keepdims=True)                        # [TC, 1]
    m2 = jnp.sum(am * acc, axis=1, keepdims=True)                  # [TC, 1]
    mean = m1 * inv_n
    var = jnp.maximum(m2 * inv_n - mean * mean, 0.0)
    scale = lax.rsqrt(var + eps)                                   # [TC, 1]

    y = acc * scale - mean * scale                                 # (x - mean) * rsqrt(var+eps)
    if use_act:
        y = jnp.maximum(y, 0.0)                                    # ReLU
    o_ref[0] = y.astype(o_ref.dtype)


def _physical_vmem_bytes():
    try:
        return int(pltpu.get_tpu_info().vmem_capacity_bytes)
    except Exception:
        return 64 * 1024 * 1024


def _pick_cout_tile(cout, n):
    # Prefer one tile (InstanceNorm is per-channel, so tiles need no cross-tile
    # reduction); 128-channel tiles for large Cout; split in two when the grid
    # would otherwise have a single step (keep both v7x TensorCores busy).
    if cout > 128 and cout % 128 == 0:
        tc = 128
    else:
        tc = cout
    if n * (cout // tc) < 2 and cout % 16 == 0:
        tc = cout // 2
    return tc


def block_forward(x, weight, bias=None, *, kernel_size=3, stride=1, padding=1,
                  use_act=True, eps=1e-5):
    """x: [N, Cin, H, W] float32 (NCHW). Returns [N, Cout, Hout, Wout] float32."""
    assert stride == 1, "only stride=1 supported in this kernel"
    N, Cin, H, W = x.shape
    Cout = weight.shape[0]
    K = kernel_size
    p = padding
    KK = K * K
    Hp, Wp = H + 2 * p, W + 2 * p
    Hout, Wout = Hp - K + 1, Wp - K + 1

    Cin_p = _round_up(Cin, 8)                    # sublane-align contraction sub-block
    L_valid = Hout * Wp                          # real (row-major, Wp-strided) columns
    L_pad = _round_up(L_valid, 128)              # lane-dense output / compute length
    max_start = (K - 1) * Wp + (K - 1)
    Lx = _round_up(max_start + L_pad, 128)       # every tap slice stays in range

    # --- wrapper glue: reflect pad + flatten spatial dims (everything else in-kernel) ---
    xp = jnp.pad(x, ((0, 0), (0, 0), (p, p), (p, p)), mode="reflect")
    xflat = xp.reshape(N, Cin, Hp * Wp)
    xflat = jnp.pad(xflat, ((0, 0), (0, Cin_p - Cin), (0, Lx - Hp * Wp)))
    xflat = xflat.astype(jnp.bfloat16)

    # Weights [Cout, Cin, K, K] -> stacked-tap matrix [Cout, K*K*Cin_p] matching
    # the taps layout (row t*Cin_p + c  <=>  tap (di, dj), input channel c).
    w_t = jnp.transpose(weight, (0, 2, 3, 1))                       # [Cout, K, K, Cin]
    w_t = jnp.pad(w_t, ((0, 0), (0, 0), (0, 0), (0, Cin_p - Cin)))
    w_t = w_t.reshape(Cout, KK * Cin_p).astype(jnp.bfloat16)

    # Conv bias dropped: InstanceNorm2d(affine=False) cancels a per-channel bias.
    del bias

    TC = _pick_cout_tile(Cout, N)
    n_ctiles = Cout // TC

    kernel = functools.partial(
        _block_kernel, K=K, Wp=Wp, Wout=Wout, L_valid=L_valid, L_pad=L_pad,
        n_valid=Hout * Wout, use_act=use_act, eps=eps)

    out_dtype = x.dtype
    out_isz = jnp.dtype(out_dtype).itemsize

    # Real per-step working set: double-buffered input/weight/output blocks,
    # the stacked-taps scratch, and the f32 acc / masked-product / y temporaries.
    block_bytes = (2 * Cin_p * Lx * 2
                   + 2 * TC * KK * Cin_p * 2
                   + 2 * TC * L_pad * out_isz
                   + KK * Cin_p * L_pad * 2
                   + 4 * TC * L_pad * 4)
    vmem_cap = int(0.85 * _physical_vmem_bytes())          # headroom for Mosaic scratch
    vmem_limit = int(min(max(int(1.25 * block_bytes), 8 * 1024 * 1024), vmem_cap))

    out = pl.pallas_call(
        kernel,
        out_shape=jax.ShapeDtypeStruct((N, Cout, L_pad), out_dtype),
        grid_spec=pltpu.PrefetchScalarGridSpec(
            num_scalar_prefetch=0,
            grid=(N, n_ctiles),
            in_specs=[
                pl.BlockSpec((1, Cin_p, Lx), lambda n, j: (n, 0, 0)),
                pl.BlockSpec((TC, KK * Cin_p), lambda n, j: (j, 0)),
            ],
            out_specs=pl.BlockSpec((1, TC, L_pad), lambda n, j: (n, j, 0)),
            scratch_shapes=[pltpu.VMEM((KK * Cin_p, L_pad), jnp.bfloat16)],
        ),
        compiler_params=pltpu.CompilerParams(
            dimension_semantics=("parallel", "parallel"),
            vmem_limit_bytes=vmem_limit),
    )(xflat, w_t)

    # Crop the lane-pad and Wp-padding scratch columns; return NCHW.
    return out[:, :, :L_valid].reshape(N, Cout, Hout, Wp)[:, :, :, :Wout]


def _reference(x, weight, bias, *, use_act=True, eps=1e-5):
    # Pure-JAX f32 reference (includes the bias, which the norm cancels).
    xp = jnp.pad(x, ((0, 0), (0, 0), (1, 1), (1, 1)), mode="reflect")
    y = lax.conv_general_dilated(
        xp, weight, window_strides=(1, 1), padding="VALID",
        dimension_numbers=("NCHW", "OIHW", "NCHW"))
    y = y + bias.reshape(1, -1, 1, 1)
    mean = jnp.mean(y, axis=(2, 3), keepdims=True)
    var = jnp.mean((y - mean) ** 2, axis=(2, 3), keepdims=True)
    y = (y - mean) / jnp.sqrt(var + eps)
    return jnp.maximum(y, 0.0) if use_act else y


if __name__ == "__main__":
    key = jax.random.PRNGKey(0)
    k_x, k_w, k_b = jax.random.split(key, 3)

    N, Cin, Cout, H, W, K = 2, 4, 8, 16, 16, 3

    x = jax.random.normal(k_x, (N, Cin, H, W), dtype=jnp.float32)
    fan_in = Cin * K * K
    weight = jax.random.normal(k_w, (Cout, Cin, K, K), dtype=jnp.float32) / jnp.sqrt(fan_in)
    bias = jax.random.normal(k_b, (Cout,), dtype=jnp.float32) * 0.1

    out = block_forward(x, weight, bias, kernel_size=K, padding=1, use_act=True)
    out = jax.block_until_ready(out)

    ref = _reference(x, weight, bias, use_act=True)
    assert out.shape == (N, Cout, H, W)
    # bf16 matmul operands (f32 accumulation) -> relaxed tolerance vs f32 reference.
    max_err = float(jnp.max(jnp.abs(out - ref)))
    assert jnp.allclose(out, ref, atol=5e-2, rtol=5e-2), max_err

    print("KERNEL_OK")
</pallas_src>

<mosaic_0001>
module attributes {stable_mosaic.version = 11 : i64} {
  func.func @_block_kernel(%arg0: i32, %arg1: i32, %arg2: memref<1x8x512xbf16, #tpu.memory_space<vmem>>, %arg3: memref<8x72xbf16, #tpu.memory_space<vmem>>, %arg4: memref<1x8x384xf32, #tpu.memory_space<vmem>>, %arg5: memref<72x384xbf16, #tpu.memory_space<vmem>>) attributes {dimension_semantics = [#tpu.dimension_semantics<parallel>, #tpu.dimension_semantics<parallel>], iteration_bounds = array<i64: 2, 1>, scalar_prefetch = 0 : i64, scratch_operands = 1 : i64, tpu.core_type = #tpu.core_type<tc>, window_params = [{transform_indices = @transform_0, window_bounds = array<i64: 1, 8, 512>}, {transform_indices = @transform_1, window_bounds = array<i64: 8, 72>}, {transform_indices = @transform_2, window_bounds = array<i64: 1, 8, 384>}]} {
    %c0 = arith.constant 0 : index
    %c0_0 = arith.constant 0 : index
    %c0_1 = arith.constant 0 : index
    %0 = vector.load %arg2[%c0, %c0_0, %c0_1] : memref<1x8x512xbf16, #tpu.memory_space<vmem>>, vector<1x8x512xbf16>
    %1 = vector.shape_cast %0 : vector<1x8x512xbf16> to vector<8x512xbf16>
    %2 = vector.extract_strided_slice %1 {offsets = [0, 0], sizes = [8, 384], strides = [1, 1]} : vector<8x512xbf16> to vector<8x384xbf16>
    %c0_2 = arith.constant 0 : index
    %c0_3 = arith.constant 0 : index
    %3 = vector.load %arg5[%c0_2, %c0_3] : memref<72x384xbf16, #tpu.memory_space<vmem>>, vector<8x384xbf16>
    tpu.vector_store %arg5[%c0_2, %c0_3], %2 {strides = array<i32>} : memref<72x384xbf16, #tpu.memory_space<vmem>>, vector<8x384xbf16>,
    %4 = vector.extract_strided_slice %1 {offsets = [0, 1], sizes = [8, 384], strides = [1, 1]} : vector<8x512xbf16> to vector<8x384xbf16>
    %c8 = arith.constant 8 : index
    %c0_4 = arith.constant 0 : index
    %5 = vector.load %arg5[%c8, %c0_4] : memref<72x384xbf16, #tpu.memory_space<vmem>>, vector<8x384xbf16>
    tpu.vector_store %arg5[%c8, %c0_4], %4 {strides = array<i32>} : memref<72x384xbf16, #tpu.memory_space<vmem>>, vector<8x384xbf16>,
    %6 = vector.extract_strided_slice %1 {offsets = [0, 2], sizes = [8, 384], strides = [1, 1]} : vector<8x512xbf16> to vector<8x384xbf16>
    %c16 = arith.constant 16 : index
    %c0_5 = arith.constant 0 : index
    %7 = vector.load %arg5[%c16, %c0_5] : memref<72x384xbf16, #tpu.memory_space<vmem>>, vector<8x384xbf16>
    tpu.vector_store %arg5[%c16, %c0_5], %6 {strides = array<i32>} : memref<72x384xbf16, #tpu.memory_space<vmem>>, vector<8x384xbf16>,
    %8 = vector.extract_strided_slice %1 {offsets = [0, 18], sizes = [8, 384], strides = [1, 1]} : vector<8x512xbf16> to vector<8x384xbf16>
    %c24 = arith.constant 24 : index
    %c0_6 = arith.constant 0 : index
    %9 = vector.load %arg5[%c24, %c0_6] : memref<72x384xbf16, #tpu.memory_space<vmem>>, vector<8x384xbf16>
    tpu.vector_store %arg5[%c24, %c0_6], %8 {strides = array<i32>} : memref<72x384xbf16, #tpu.memory_space<vmem>>, vector<8x384xbf16>,
    %10 = vector.extract_strided_slice %1 {offsets = [0, 19], sizes = [8, 384], strides = [1, 1]} : vector<8x512xbf16> to vector<8x384xbf16>
    %c32 = arith.constant 32 : index
    %c0_7 = arith.constant 0 : index
    %11 = vector.load %arg5[%c32, %c0_7] : memref<72x384xbf16, #tpu.memory_space<vmem>>, vector<8x384xbf16>
    tpu.vector_store %arg5[%c32, %c0_7], %10 {strides = array<i32>} : memref<72x384xbf16, #tpu.memory_space<vmem>>, vector<8x384xbf16>,
    %12 = vector.extract_strided_slice %1 {offsets = [0, 20], sizes = [8, 384], strides = [1, 1]} : vector<8x512xbf16> to vector<8x384xbf16>
    %c40 = arith.constant 40 : index
    %c0_8 = arith.constant 0 : index
    %13 = vector.load %arg5[%c40, %c0_8] : memref<72x384xbf16, #tpu.memory_space<vmem>>, vector<8x384xbf16>
    tpu.vector_store %arg5[%c40, %c0_8], %12 {strides = array<i32>} : memref<72x384xbf16, #tpu.memory_space<vmem>>, vector<8x384xbf16>,
    %14 = vector.extract_strided_slice %1 {offsets = [0, 36], sizes = [8, 384], strides = [1, 1]} : vector<8x512xbf16> to vector<8x384xbf16>
    %c48 = arith.constant 48 : index
    %c0_9 = arith.constant 0 : index
    %15 = vector.load %arg5[%c48, %c0_9] : memref<72x384xbf16, #tpu.memory_space<vmem>>, vector<8x384xbf16>
    tpu.vector_store %arg5[%c48, %c0_9], %14 {strides = array<i32>} : memref<72x384xbf16, #tpu.memory_space<vmem>>, vector<8x384xbf16>,
    %16 = vector.extract_strided_slice %1 {offsets = [0, 37], sizes = [8, 384], strides = [1, 1]} : vector<8x512xbf16> to vector<8x384xbf16>
    %c56 = arith.constant 56 : index
    %c0_10 = arith.constant 0 : index
    %17 = vector.load %arg5[%c56, %c0_10] : memref<72x384xbf16, #tpu.memory_space<vmem>>, vector<8x384xbf16>
    tpu.vector_store %arg5[%c56, %c0_10], %16 {strides = array<i32>} : memref<72x384xbf16, #tpu.memory_space<vmem>>, vector<8x384xbf16>,
    %18 = vector.extract_strided_slice %1 {offsets = [0, 38], sizes = [8, 384], strides = [1, 1]} : vector<8x512xbf16> to vector<8x384xbf16>
    %c64 = arith.constant 64 : index
    %c0_11 = arith.constant 0 : index
    %19 = vector.load %arg5[%c64, %c0_11] : memref<72x384xbf16, #tpu.memory_space<vmem>>, vector<8x384xbf16>
    tpu.vector_store %arg5[%c64, %c0_11], %18 {strides = array<i32>} : memref<72x384xbf16, #tpu.memory_space<vmem>>, vector<8x384xbf16>,
    %c0_12 = arith.constant 0 : index
    %c0_13 = arith.constant 0 : index
    %20 = vector.load %arg3[%c0_12, %c0_13] : memref<8x72xbf16, #tpu.memory_space<vmem>>, vector<8x72xbf16>
    %c0_14 = arith.constant 0 : index
    %c0_15 = arith.constant 0 : index
    %21 = vector.load %arg5[%c0_14, %c0_15] : memref<72x384xbf16, #tpu.memory_space<vmem>>, vector<72x384xbf16>
    %cst = arith.constant dense<0.000000e+00> : vector<8x384xf32>
    %22 = tpu.matmul %20, %21, %cst {dimension_numbers = #tpu.dot_dimension_numbers<[1], [0], [0], [1], [0, 0, 1, 1], [], []>} : vector<8x72xbf16>, vector<72x384xbf16>, vector<8x384xf32> -> vector<8x384xf32>
    %23 = tpu.iota {dimensions = array<i32: 1>} : vector<1x384xi32>
    %c18_i32 = arith.constant 18 : i32
    %c0_i32 = arith.constant 0 : i32
    %24 = arith.cmpi eq, %c18_i32, %c0_i32 : i32
    %c1_i32 = arith.constant 1 : i32
    %25 = arith.select %24, %c1_i32, %c18_i32 : i32
    %26 = vector.broadcast %25 : i32 to vector<1x384xi32>
    %27 = arith.remsi %23, %26 : vector<1x384xi32>
    %c0_i32_16 = arith.constant 0 : i32
    %28 = vector.broadcast %c0_i32_16 : i32 to vector<1x384xi32>
    %29 = arith.cmpi ne, %27, %28 : vector<1x384xi32>
    %c0_i32_17 = arith.constant 0 : i32
    %30 = vector.broadcast %c0_i32_17 : i32 to vector<1x384xi32>
    %31 = arith.cmpi slt, %27, %30 : vector<1x384xi32>
    %c0_i32_18 = arith.constant 0 : i32
    %32 = arith.cmpi slt, %25, %c0_i32_18 : i32
    %33 = vector.broadcast %32 : i1 to vector<1x384xi1>
    %34 = vector.broadcast %33 : vector<1x384xi1> to vector<1x384xi1>
    %35 = arith.xori %31, %34 : vector<1x384xi1>
    %36 = arith.andi %35, %29 : vector<1x384xi1>
    %37 = vector.broadcast %25 : i32 to vector<1x384xi32>
    %38 = arith.addi %27, %37 : vector<1x384xi32>
    %39 = arith.select %36, %38, %27 : vector<1x384xi1>, vector<1x384xi32>
    %c16_i32 = arith.constant 16 : i32
    %40 = vector.broadcast %c16_i32 : i32 to vector<1x384xi32>
    %41 = arith.cmpi slt, %39, %40 : vector<1x384xi32>
    %c288_i32 = arith.constant 288 : i32
    %42 = vector.broadcast %c288_i32 : i32 to vector<1x384xi32>
    %43 = arith.cmpi slt, %23, %42 : vector<1x384xi32>
    %44 = arith.andi %41, %43 : vector<1x384xi1>
    %cst_19 = arith.constant 1.000000e+00 : f32
    %cst_20 = arith.constant 0.000000e+00 : f32
    %45 = vector.broadcast %cst_19 : f32 to vector<1x384xf32>
    %46 = vector.broadcast %cst_20 : f32 to vector<1x384xf32>
    %47 = arith.select %44, %45, %46 : vector<1x384xi1>, vector<1x384xf32>
    %48 = vector.broadcast %47 : vector<1x384xf32> to vector<8x384xf32>
    %49 = arith.mulf %22, %48 : vector<8x384xf32>
    %cst_21 = arith.constant dense<0.000000e+00> : vector<8xf32>
    %50 = vector.multi_reduction <add>, %49, %cst_21 [1] : vector<8x384xf32> to vector<8xf32>
    %51 = vector.shape_cast %50 : vector<8xf32> to vector<8x1xf32>
    %52 = arith.mulf %49, %22 : vector<8x384xf32>
    %cst_22 = arith.constant dense<0.000000e+00> : vector<8xf32>
    %53 = vector.multi_reduction <add>, %52, %cst_22 [1] : vector<8x384xf32> to vector<8xf32>
    %54 = vector.shape_cast %53 : vector<8xf32> to vector<8x1xf32>
    %cst_23 = arith.constant 3.906250e-03 : f32
    %55 = vector.broadcast %cst_23 : f32 to vector<8x1xf32>
    %56 = arith.mulf %51, %55 : vector<8x1xf32>
    %cst_24 = arith.constant 3.906250e-03 : f32
    %57 = vector.broadcast %cst_24 : f32 to vector<8x1xf32>
    %58 = arith.mulf %54, %57 : vector<8x1xf32>
    %59 = arith.mulf %56, %56 : vector<8x1xf32>
    %60 = arith.subf %58, %59 : vector<8x1xf32>
    %cst_25 = arith.constant 0.000000e+00 : f32
    %61 = vector.broadcast %cst_25 : f32 to vector<8x1xf32>
    %62 = arith.maximumf %60, %61 : vector<8x1xf32>
    %cst_26 = arith.constant 9.99999974E-6 : f32
    %63 = vector.broadcast %cst_26 : f32 to vector<8x1xf32>
    %64 = arith.addf %62, %63 : vector<8x1xf32>
    %65 = math.rsqrt %64 : vector<8x1xf32>
    %66 = vector.broadcast %65 : vector<8x1xf32> to vector<8x384xf32>
    %67 = arith.mulf %22, %66 : vector<8x384xf32>
    %68 = arith.mulf %56, %65 : vector<8x1xf32>
    %69 = vector.broadcast %68 : vector<8x1xf32> to vector<8x384xf32>
    %70 = arith.subf %67, %69 : vector<8x384xf32>
    %cst_27 = arith.constant 0.000000e+00 : f32
    %71 = vector.broadcast %cst_27 : f32 to vector<8x384xf32>
    %72 = arith.maximumf %70, %71 : vector<8x384xf32>
    %c0_28 = arith.constant 0 : index
    %c0_29 = arith.constant 0 : index
    %c0_30 = arith.constant 0 : index
    %73 = vector.load %arg4[%c0_28, %c0_29, %c0_30] : memref<1x8x384xf32, #tpu.memory_space<vmem>>, vector<1x8x384xf32>
    %74 = vector.shape_cast %73 : vector<1x8x384xf32> to vector<8x384xf32>
    %75 = vector.shape_cast %72 : vector<8x384xf32> to vector<1x8x384xf32>
    tpu.vector_store %arg4[%c0_28, %c0_29, %c0_30], %75 {strides = array<i32>} : memref<1x8x384xf32, #tpu.memory_space<vmem>>, vector<1x8x384xf32>,
    return
  }
  func.func @transform_0(%arg0: i32, %arg1: i32) -> (i32, i32, i32) {
    %c0_i32 = arith.constant 0 : i32
    %c0_i32_0 = arith.constant 0 : i32
    %c0_i32_1 = arith.constant 0 : i32
    return %arg0, %c0_i32, %c0_i32_0 : i32, i32, i32
  }
  func.func @transform_1(%arg0: i32, %arg1: i32) -> (i32, i32) {
    %c0_i32 = arith.constant 0 : i32
    %c0_i32_0 = arith.constant 0 : i32
    return %arg1, %c0_i32 : i32, i32
  }
  func.func @transform_2(%arg0: i32, %arg1: i32) -> (i32, i32, i32) {
    %c0_i32 = arith.constant 0 : i32
    %c0_i32_0 = arith.constant 0 : i32
    return %arg0, %arg1, %c0_i32 : i32, i32, i32
  }
}

</mosaic_0001>

<llo_original>
// kernel: tpu_custom_call.1
$region0: #{tpu_custom_call.1}
  #allocation0 [shape = 'u32[]', space=smem, size = 0x4, offset = 0x4, fixed_abs, tag = 'smem constant byte address 0x4 - core index']
  #allocation1 [shape = 'u32[144,128]{1,0:T(1,128)}', space=vmem, size = 0x12000, scoped, tag = 'internal scratch']
  #allocation2 [shape = 'bf16[72,384]{1,0:T(8,128)(2,1)}', space=vmem, size = 0xd800, scoped, tag = 'scratch operand']
  %s0 = inlined_call_operand.hbm [shape: bf16[2,8,512], index: 0, kind: input, shape index: {}]
  %s1 = inlined_call_operand.hbm [shape: bf16[8,72], index: 1, kind: input, shape index: {}]
  %s2 = inlined_call_operand.hbm [shape: f32[2,8,384], index: 2, kind: output, shape index: {}]
  %s3 = sld [smem:[#allocation0]]
  $region49: #{tpu_custom_call.1} parent=0
    _
  %s5 = ssub.s32 1, %s3
  %s6 = scalar_select 0, %s5, %s3
  $region1: #{tpu_custom_call.1} parent=0
    #allocation3 [shape = 'u8[16384]{0}', space=vmem, size = 0x4000, scoped, tag = 'input window, operand 0']
    #allocation4 [shape = 's32[2]{0}', space=sflag, size = 0x8, scoped, tag = 'scoped memory for tpu_custom_call.1']
    #allocation5 [shape = 's32[2]{0}', space=sflag, size = 0x8, scoped, tag = 'scoped memory for tpu_custom_call.1']
    #allocation6 [shape = 'u8[2048]{0}', space=vmem, size = 0x800, scoped, tag = 'input window, operand 1, single buffered']
    #allocation7 [shape = 's32[1]{0}', space=sflag, size = 0x4, scoped, tag = 'scoped memory for tpu_custom_call.1']
    #allocation8 [shape = 'u8[24576]{0}', space=vmem, size = 0x6000, scoped, tag = 'output window, operand 0']
    %7 = vsyncpa [#allocation4], 0
    %s8 = scalar_lea.sflag [#allocation4], 1
    %9 = vsyncpa %s8, 0
    %10 = vsyncpa [#allocation7], 0
    %11 = vsyncpa [#allocation5], 0
    %s12 = scalar_lea.sflag [#allocation5], 1
    %13 = vsyncpa %s12, 0
    loop: start=0, step=1, limit=4
    $region2: #{tpu_custom_call.1} parent=1 // loop_pre_header
      _
    $region3: #{tpu_custom_call.1} parent=1 // loop_header
      %s15 = sphi 0, %s19
      %p16 = scmp.ge.s32.totalorder %s15, 4
      %s22 = sphi 0, %s34
      %s23 = sphi 0, %s30
      %s24 = sphi 0, %s22
      %s25 = sphi 0, %s23
      %s26 = sphi 0, %s24
      %s27 = sphi 0, %s25
      %s37 = sphi 0, %s39
      %s40 = sphi 0, %s37
      %s41 = sphi 0, %s40
      %s57 = sphi 0, %s41
      %s63 = sphi 0, %s65
      %s66 = sphi 0, %s63
      %s67 = sphi 0, %s66
      %s83 = sphi 0, %s67
      %s91 = sphi 0, %s93
      %s94 = sphi 0, %s91
      %s95 = sphi 0, %s94
      %s111 = sphi 0, %s95
    $region4: #{tpu_custom_call.1} parent=1 // loop_header_branch
      %18 = sbr.rel (%p16) target = $region8
    $region5: #{tpu_custom_call.1} parent=1 // loop_body
      %s20 = ssub.s32 %s15, 1
      %s21 = ssub.s32 %s15, 2
      %s28 = sadd.s32 1, %s23
      %p29 = scmp.ge.s32.totalorder %s28, 1
      %s30 = scalar_select %p29, 0, %s28
      %s31 = sadd.s32 1, %s22
      %s32 = scalar_select %p29, %s31, %s22
      %p33 = scmp.ge.s32.totalorder %s32, 2
      %s34 = scalar_select %p33, 0, %s32
      %s35 = ssub.s32 %s22, %s34
      %p36 = scmp.eq.s32.totalorder %s35, 0
      %s38 = sadd.s32 %s37, 1
      %s39 = scalar_select %p36, %s37, %s38
      %p42 = pneg %p36
      %p43 = scmp.eq.s32.totalorder %s15, 1
      %p44 = por %p42, %p43
      %p45 = scmp.ne.s32.totalorder %s37, %s40
      %p46 = scmp.eq.s32.totalorder %s15, 0
      %p47 = por %p45, %p46
      %p48 = scmp.ne.s32.totalorder %s37, %s40
      %p49 = scmp.eq.s32.totalorder %s20, 1
      %p50 = por %p48, %p49
      %p51 = scmp.ne.s32.totalorder %s40, %s41
      %p52 = scmp.eq.s32.totalorder %s20, 0
      %p53 = por %p51, %p52
      %p54 = scmp.ne.s32.totalorder %s40, %s41
      %p55 = scmp.eq.s32.totalorder %s21, 1
      %p56 = por %p54, %p55
      %p58 = scmp.ne.s32.totalorder %s41, %s57
      %p59 = scmp.eq.s32.totalorder %s21, 0
      %p60 = por %p58, %p59
      %s61 = ssub.s32 %s23, %s30
      %p62 = scmp.eq.s32.totalorder %s61, 0
      %s64 = sadd.s32 %s63, 1
      %s65 = scalar_select %p62, %s63, %s64
      %p68 = pneg %p62
      %p69 = scmp.eq.s32.totalorder %s15, 1
      %p70 = por %p68, %p69
      %p71 = scmp.ne.s32.totalorder %s63, %s66
      %p72 = scmp.eq.s32.totalorder %s15, 0
      %p73 = por %p71, %p72
      %p74 = scmp.ne.s32.totalorder %s63, %s66
      %p75 = scmp.eq.s32.totalorder %s20, 1
      %p76 = por %p74, %p75
      %p77 = scmp.ne.s32.totalorder %s66, %s67
      %p78 = scmp.eq.s32.totalorder %s20, 0
      %p79 = por %p77, %p78
      %p80 = scmp.ne.s32.totalorder %s66, %s67
      %p81 = scmp.eq.s32.totalorder %s21, 1
      %p82 = por %p80, %p81
      %p84 = scmp.ne.s32.totalorder %s67, %s83
      %p85 = scmp.eq.s32.totalorder %s21, 0
      %p86 = por %p84, %p85
      %s87 = ssub.s32 %s22, %s34
      %s88 = ssub.s32 %s23, %s30
      %s89 = sor.u32 %s87, %s88
      %p90 = scmp.eq.s32.totalorder %s89, 0
      %s92 = sadd.s32 %s91, 1
      %s93 = scalar_select %p90, %s91, %s92
      %p96 = pneg %p90
      %p97 = scmp.eq.s32.totalorder %s15, 1
      %p98 = por %p96, %p97
      %p99 = scmp.ne.s32.totalorder %s91, %s94
      %p100 = scmp.eq.s32.totalorder %s15, 0
      %p101 = por %p99, %p100
      %p102 = scmp.ne.s32.totalorder %s91, %s94
      %p103 = scmp.eq.s32.totalorder %s20, 1
      %p104 = por %p102, %p103
      %p105 = scmp.ne.s32.totalorder %s94, %s95
      %p106 = scmp.eq.s32.totalorder %s20, 0
      %p107 = por %p105, %p106
      %p108 = scmp.ne.s32.totalorder %s94, %s95
      %p109 = scmp.eq.s32.totalorder %s21, 1
      %p110 = por %p108, %p109
      %p112 = scmp.ne.s32.totalorder %s95, %s111
      %p113 = scmp.eq.s32.totalorder %s21, 0
      %p114 = por %p112, %p113
      %p115 = scmp.le.s32.totalorder 1, %s15
      %p116 = scmp.lt.s32.totalorder %s15, 3
      %p117 = pnand %p115, %p116
      %p118 = pneg %p117
      // Predicated region
      $region9: #{tpu_custom_call.1} parent=5 // pred_check
        _
      $region10: #{tpu_custom_call.1} parent=5 // pred_check_branch
        %120 = sbr.rel (%p117) target = $region12
      $region11: #{tpu_custom_call.1} parent=5 // pred_region
        %s121 = ssub.s32 %s15, 1
        // Predicated region
        $region13: #{tpu_custom_call.1} parent=11 // pred_check
          %p122 = pneg %p79
        $region14: #{tpu_custom_call.1} parent=11 // pred_check_branch
          %124 = sbr.rel (%p122) target = $region16
        $region15: #{tpu_custom_call.1} parent=11 // pred_region
          %s126 = ssub.s32 64, 64
          %127 = vsyncadd [#allocation7], %s126
          %s128 = smul.addr %s25, 64
          %s129 = scalar_lea.hbm %s1, %s128
          %s131 = sshll.u32 [#allocation6], 4
          %s132 = int_to_ptr.vmem [resolvable:$true] %s131
          %134 = dma.hbm_to_vmem [thread:$0]  %s129, 64, %s132, [#allocation7]
        $region16: #{tpu_custom_call.1} parent=11 // pred_fallthru
          _
      $region12: #{tpu_custom_call.1} parent=5 // pred_fallthru
        _
      %p135 = scmp.lt.s32.totalorder %s15, 2
      // Predicated region
      $region17: #{tpu_custom_call.1} parent=5 // pred_check
        %p136 = pneg %p135
      $region18: #{tpu_custom_call.1} parent=5 // pred_check_branch
        %138 = sbr.rel (%p136) target = $region20
      $region19: #{tpu_custom_call.1} parent=5 // pred_region
        // Predicated region
        $region21: #{tpu_custom_call.1} parent=19 // pred_check
          %p139 = pneg %p47
        $region22: #{tpu_custom_call.1} parent=19 // pred_check_branch
          %141 = sbr.rel (%p139) target = $region24
        $region23: #{tpu_custom_call.1} parent=19 // pred_region
          %s142 = sand.u32 %s37, 1
          %s143 = scalar_lea.sflag [#allocation4], %s142
          %s144 = sand.u32 %s37, 1
          %s145 = smul.addr %s144, 16
          %s146 = scalar_lea.vmem [#allocation3], %s145
          %s148 = ssub.s32 256, 256
          %149 = vsyncadd %s143, %s148
          %s150 = smul.addr %s22, 4
          %s151 = smul.addr %s150, 64
          %s152 = scalar_lea.hbm %s0, %s151
          %s154 = sshll.u32 %s146, 4
          %s155 = int_to_ptr.vmem [resolvable:$true] %s154
          %157 = dma.hbm_to_vmem [thread:$0]  %s152, 256, %s155, %s143
        $region24: #{tpu_custom_call.1} parent=19 // pred_fallthru
          _
      $region20: #{tpu_custom_call.1} parent=5 // pred_fallthru
        _
      %p158 = scmp.le.s32.totalorder 1, %s15
      %p159 = scmp.lt.s32.totalorder %s15, 3
      %p160 = pnand %p158, %p159
      %p161 = pneg %p160
      // Predicated region
      $region25: #{tpu_custom_call.1} parent=5 // pred_check
        _
      $region26: #{tpu_custom_call.1} parent=5 // pred_check_branch
        %163 = sbr.rel (%p160) target = $region28
      $region27: #{tpu_custom_call.1} parent=5 // pred_region
        %s164 = ssub.s32 %s15, 1
        %s165 = sand.u32 %s40, 1
        %s166 = scalar_lea.sflag [#allocation4], %s165
        %s167 = sand.u32 %s40, 1
        %s168 = smul.addr %s167, 16
        %s169 = scalar_lea.vmem [#allocation3], %s168
        // Predicated region
        $region29: #{tpu_custom_call.1} parent=27 // pred_check
          %p170 = pneg %p53
        $region30: #{tpu_custom_call.1} parent=27 // pred_check_branch
          %172 = sbr.rel (%p170) target = $region32
        $region31: #{tpu_custom_call.1} parent=27 // pred_region
          %173 = dma.done %s166, 256
        $region32: #{tpu_custom_call.1} parent=27 // pred_fallthru
          _
        // Predicated region
        $region33: #{tpu_custom_call.1} parent=27 // pred_check
          %p174 = pneg %p79
        $region34: #{tpu_custom_call.1} parent=27 // pred_check_branch
          %176 = sbr.rel (%p174) target = $region36
        $region35: #{tpu_custom_call.1} parent=27 // pred_region
          %177 = dma.done [#allocation7], 64
        $region36: #{tpu_custom_call.1} parent=27 // pred_fallthru
          _
        %s178 = sand.u32 %s40, 1
        %s179 = scalar_lea.sflag [#allocation4], %s178
        %s180 = sand.u32 %s40, 1
        %s181 = smul.addr %s180, 16
        %s182 = scalar_lea.vmem [#allocation3], %s181
        %p183 = pneg %p53
        %p184 = pneg %p50
        %p185 = pneg %p79
        %p186 = pneg %p76
        %p187 = pneg %p107
        %p188 = pneg %p104
        %s189 = sand.u32 %s94, 1
        %s190 = scalar_lea.sflag [#allocation5], %s189
        %s191 = sand.u32 %s94, 1
        %s192 = smul.addr %s191, 24
        %s193 = scalar_lea.vmem [#allocation8], %s192
        %v195 = vld [vmem:[%s169] sm:$0xff]
        %v196 = vld [vmem:[%s169 + $0x8] sm:$0xff]
        %197 = vst [vmem:[#allocation2] sm:$0xff] %v195
        %198 = vst [vmem:[#allocation2 + $0x8] sm:$0xf] %v196
        %201 = vrot.lane.b32.xlu0 %v195, 127
        %v202 = vpop.permute.xlu0 %201
        %203 = vrot.lane.b32.xlu0 %v196, 127
        %v204 = vpop.permute.xlu0 %203
        %v205 = vrot.slane %v202, 4
        %v206 = vrot.slane %v204, 4
        %vm207 = vcmask 1043456
        %v208 = vsel %vm207, %v205, %v206
        %vm209 = vcmask 1039360
        %v210 = vsel %vm209, %v202, %v208
        %v211 = vsel %vm209, %v204, %v206
        %214 = vst [vmem:[#allocation2 + $0xc] sm:$0xff] %v210
        %215 = vst [vmem:[#allocation2 + $0x14] sm:$0xf] %v211
        %216 = vrot.lane.b32.xlu0 %v195, 126
        %v217 = vpop.permute.xlu0 %216
        %218 = vrot.lane.b32.xlu0 %v196, 126
        %v219 = vpop.permute.xlu0 %218
        %v220 = vrot.slane %v217, 4
        %v221 = vrot.slane %v219, 4
        %v222 = vsel %vm207, %v220, %v221
        %vm223 = vcmask 1031168
        %v224 = vsel %vm223, %v217, %v222
        %v225 = vsel %vm223, %v219, %v221
        %228 = vst [vmem:[#allocation2 + $0x18] sm:$0xff] %v224
        %229 = vst [vmem:[#allocation2 + $0x20] sm:$0xf] %v225
        %230 = vrot.lane.b32.xlu0 %v195, 110
        %v231 = vpop.permute.xlu0 %230
        %232 = vrot.lane.b32.xlu0 %v196, 110
        %v233 = vpop.permute.xlu0 %232
        %v234 = vrot.slane %v231, 4
        %v235 = vrot.slane %v233, 4
        %v236 = vsel %vm207, %v234, %v235
        %vm237 = vcmask 900096
        %v238 = vsel %vm237, %v231, %v236
        %v239 = vsel %vm237, %v233, %v235
        %242 = vst [vmem:[#allocation2 + $0x24] sm:$0xff] %v238
        %243 = vst [vmem:[#allocation2 + $0x2c] sm:$0xf] %v239
        %244 = vrot.lane.b32.xlu0 %v195, 109
        %v245 = vpop.permute.xlu0 %244
        %246 = vrot.lane.b32.xlu0 %v196, 109
        %v247 = vpop.permute.xlu0 %246
        %v248 = vrot.slane %v245, 4
        %v249 = vrot.slane %v247, 4
        %v250 = vsel %vm207, %v248, %v249
        %vm251 = vcmask 891904
        %v252 = vsel %vm251, %v245, %v250
        %v253 = vsel %vm251, %v247, %v249
        %256 = vst [vmem:[#allocation2 + $0x30] sm:$0xff] %v252
        %257 = vst [vmem:[#allocation2 + $0x38] sm:$0xf] %v253
        %258 = vrot.lane.b32.xlu0 %v195, 108
        %v259 = vpop.permute.xlu0 %258
        %260 = vrot.lane.b32.xlu0 %v196, 108
        %v261 = vpop.permute.xlu0 %260
        %v262 = vrot.slane %v259, 4
        %v263 = vrot.slane %v261, 4
        %v264 = vsel %vm207, %v262, %v263
        %vm265 = vcmask 883712
        %v266 = vsel %vm265, %v259, %v264
        %v267 = vsel %vm265, %v261, %v263
        %270 = vst [vmem:[#allocation2 + $0x3c] sm:$0xff] %v266
        %271 = vst [vmem:[#allocation2 + $0x44] sm:$0xf] %v267
        %272 = vrot.lane.b32.xlu0 %v195, 92
        %v273 = vpop.permute.xlu0 %272
        %274 = vrot.lane.b32.xlu0 %v196, 92
        %v275 = vpop.permute.xlu0 %274
        %v276 = vrot.slane %v273, 4
        %v277 = vrot.slane %v275, 4
        %v278 = vsel %vm207, %v276, %v277
        %vm279 = vcmask 752640
        %v280 = vsel %vm279, %v273, %v278
        %v281 = vsel %vm279, %v275, %v277
        %284 = vst [vmem:[#allocation2 + $0x48] sm:$0xff] %v280
        %285 = vst [vmem:[#allocation2 + $0x50] sm:$0xf] %v281
        %286 = vrot.lane.b32.xlu0 %v195, 91
        %v287 = vpop.permute.xlu0 %286
        %288 = vrot.lane.b32.xlu0 %v196, 91
        %v289 = vpop.permute.xlu0 %288
        %v290 = vrot.slane %v287, 4
        %v291 = vrot.slane %v289, 4
        %v292 = vsel %vm207, %v290, %v291
        %vm293 = vcmask 744448
        %v294 = vsel %vm293, %v287, %v292
        %v295 = vsel %vm293, %v289, %v291
        %298 = vst [vmem:[#allocation2 + $0x54] sm:$0xff] %v294
        %299 = vst [vmem:[#allocation2 + $0x5c] sm:$0xf] %v295
        %300 = vrot.lane.b32.xlu0 %v195, 90
        %v301 = vpop.permute.xlu0 %300
        %302 = vrot.lane.b32.xlu0 %v196, 90
        %v303 = vpop.permute.xlu0 %302
        %v304 = vrot.slane %v301, 4
        %v305 = vrot.slane %v303, 4
        %v306 = vsel %vm207, %v304, %v305
        %vm307 = vcmask 736256
        %v308 = vsel %vm307, %v301, %v306
        %v309 = vsel %vm307, %v303, %v305
        %312 = vst [vmem:[#allocation2 + $0x60] sm:$0xff] %v308
        %313 = vst [vmem:[#allocation2 + $0x68] sm:$0xf] %v309
        %v314 = vld [vmem:[#allocation6] sm:$0xf]
        %v315 = vld [vmem:[#allocation2] sm:$0xff]
        %v316 = vld [vmem:[#allocation2 + $0x8] sm:$0xf]
        %v317 = vld [vmem:[#allocation2 + $0xc] sm:$0xff]
        %v318 = vld [vmem:[#allocation2 + $0x14] sm:$0xf]
        %v319 = vld [vmem:[#allocation2 + $0x18] sm:$0xff]
        %v320 = vld [vmem:[#allocation2 + $0x20] sm:$0xf]
        %v321 = vld [vmem:[#allocation2 + $0x24] sm:$0xff]
        %v322 = vld [vmem:[#allocation2 + $0x2c] sm:$0xf]
        %v323 = vld [vmem:[#allocation2 + $0x30] sm:$0xff]
        %v324 = vld [vmem:[#allocation2 + $0x38] sm:$0xf]
        %v325 = vld [vmem:[#allocation2 + $0x3c] sm:$0xff]
        %v326 = vld [vmem:[#allocation2 + $0x44] sm:$0xf]
        %v327 = vld [vmem:[#allocation2 + $0x48] sm:$0xff]
        %v328 = vld [vmem:[#allocation2 + $0x50] sm:$0xf]
        %v329 = vld [vmem:[#allocation2 + $0x54] sm:$0xff]
        %v330 = vld [vmem:[#allocation2 + $0x5c] sm:$0xf]
        %v331 = vld [vmem:[#allocation2 + $0x60] sm:$0xff]
        %v332 = vld [vmem:[#allocation2 + $0x68] sm:$0xf]
        %v351 = vunpack.c.l.b16 %v315
        %v352 = vunpack.c.h.b16 %v315
        %v353 = vunpack.c.l.b16 %v316
        %v354 = vunpack.c.l.b16 %v317
        %v355 = vunpack.c.h.b16 %v317
        %v356 = vunpack.c.l.b16 %v318
        %v357 = vunpack.c.l.b16 %v319
        %v358 = vunpack.c.h.b16 %v319
        %v359 = vunpack.c.l.b16 %v320
        %v360 = vunpack.c.l.b16 %v321
        %v361 = vunpack.c.h.b16 %v321
        %v362 = vunpack.c.l.b16 %v322
        %v363 = vunpack.c.l.b16 %v323
        %v364 = vunpack.c.h.b16 %v323
        %v365 = vunpack.c.l.b16 %v324
        %v366 = vunpack.c.l.b16 %v325
        %v367 = vunpack.c.h.b16 %v325
        %v368 = vunpack.c.l.b16 %v326
        %v369 = vunpack.c.l.b16 %v327
        %v370 = vunpack.c.h.b16 %v327
        %v371 = vunpack.c.l.b16 %v328
        %v372 = vunpack.c.l.b16 %v329
        %v373 = vunpack.c.h.b16 %v329
        %v374 = vunpack.c.l.b16 %v330
        %v375 = vunpack.c.l.b16 %v331
        %v376 = vunpack.c.h.b16 %v331
        %v377 = vunpack.c.l.b16 %v332
        %v378 = vpack.c.b16 %v354, %v351
        %v379 = vpack.c.b16 %v355, %v352
        %v380 = vpack.c.b16 %v356, %v353
        %v381 = vpack.c.b16 %v360, %v357
        %v382 = vpack.c.b16 %v361, %v358
        %v383 = vpack.c.b16 %v362, %v359
        %v384 = vpack.c.b16 %v366, %v363
        %v385 = vpack.c.b16 %v367, %v364
        %v386 = vpack.c.b16 %v368, %v365
        %v387 = vpack.c.b16 %v372, %v369
        %v388 = vpack.c.b16 %v373, %v370
        %v389 = vpack.c.b16 %v374, %v371
        %v390 = vpack.c.b16 %v375, %v375
        %v391 = vpack.c.b16 %v376, %v376
        %v392 = vpack.c.b16 %v377, %v377
        %vm405 = vcmask 588800
        %v407 = vsel %vm405, %v314, 0
        %vm409 = vcmask 1043456
        %v411 = vsel %vm409, %v390, 0
        %v414 = vsel %vm409, %v391, 0
        %v417 = vsel %vm409, %v392, 0
        %419 = vmatprep.subr.bf16.mxu0 %v379
        %420 = vmatpush1.bf16.msra.mxu0 %v378
        %421 = vmatprep.subr.bf16.mxu0 %v382
        %422 = vmatpush1.bf16.msra.mxu0 %v381
        %423 = vmatprep.subr.bf16.mxu0 %v385
        %424 = vmatpush1.bf16.msra.mxu0 %v384
        %425 = vmatprep.subr.bf16.mxu0 %v388
        %426 = vmatpush1.bf16.msra.mxu0 %v387
        %427 = vmatprep.subr.bf16.mxu0 %v414
        %428 = vmatpush1.bf16.msra.mxu0 %v411
        %429 = vmatprep.subr.bf16.mxu0 0
        %430 = vmatpush1.bf16.msra.mxu0 0
        %431 = vmatprep.subr.bf16.mxu0 0
        %432 = vmatpush1.bf16.msra.mxu0 0
        %433 = vmatprep.subr.bf16.mxu0 0
        %434 = vmatpush1.bf16.msra.mxu0 0
        %435 = vmatprep.subr.bf16.mxu0 0
        %436 = vmatpush1.bf16.msra.mxu0 0
        %437 = vmatprep.subr.bf16.mxu0 0
        %438 = vmatpush1.bf16.msra.mxu0 0
        %439 = vmatprep.subr.bf16.mxu0 0
        %440 = vmatpush1.bf16.msra.mxu0 0
        %441 = vmatprep.subr.bf16.mxu0 0
        %442 = vmatpush1.bf16.msra.mxu0 0
        %443 = vmatprep.subr.bf16.mxu0 0
        %444 = vmatpush1.bf16.msra.mxu0 0
        %445 = vmatprep.subr.bf16.mxu0 0
        %446 = vmatpush1.bf16.msra.mxu0 0
        %447 = vmatprep.subr.bf16.mxu0 0
        %448 = vmatpush1.bf16.msra.mxu0 0
        %449 = vmatprep.subr.bf16.mxu0 0
        %450 = vmatpush1.bf16.msra.mxu0 0
        %451 = vmatprep.mubr.bf16.mxu0 0
        %452 = vmatmul.mubr.bf16.gmra.mrb[0].mxu0 %v407
        %v453 = vpop.f32.mrb[0].mxu0
        %v454 = vadd.f32 0.0, %v453
        %v455 = vpop.f32.mrb[0].mxu0
        %v456 = vadd.f32 0.0, %v455
        %v457 = vpop.f32.mrb[0].mxu0
        %v458 = vpop.f32.mrb[0].mxu0
        %459 = vdwg.mxu0
        %460 = vmatprep.subr.bf16.mxu0 0
        %461 = vmatpush1.bf16.msra.mxu0 %v380
        %462 = vmatprep.subr.bf16.mxu0 0
        %463 = vmatpush1.bf16.msra.mxu0 %v383
        %464 = vmatprep.subr.bf16.mxu0 0
        %465 = vmatpush1.bf16.msra.mxu0 %v386
        %466 = vmatprep.subr.bf16.mxu0 0
        %467 = vmatpush1.bf16.msra.mxu0 %v389
        %468 = vmatprep.subr.bf16.mxu0 0
        %469 = vmatpush1.bf16.msra.mxu0 %v417
        %470 = vmatprep.subr.bf16.mxu0 0
        %471 = vmatpush1.bf16.msra.mxu0 0
        %472 = vmatprep.subr.bf16.mxu0 0
        %473 = vmatpush1.bf16.msra.mxu0 0
        %474 = vmatprep.subr.bf16.mxu0 0
        %475 = vmatpush1.bf16.msra.mxu0 0
        %476 = vmatprep.subr.bf16.mxu0 0
        %477 = vmatpush1.bf16.msra.mxu0 0
        %478 = vmatprep.subr.bf16.mxu0 0
        %479 = vmatpush1.bf16.msra.mxu0 0
        %480 = vmatprep.subr.bf16.mxu0 0
        %481 = vmatpush1.bf16.msra.mxu0 0
        %482 = vmatprep.subr.bf16.mxu0 0
        %483 = vmatpush1.bf16.msra.mxu0 0
        %484 = vmatprep.subr.bf16.mxu0 0
        %485 = vmatpush1.bf16.msra.mxu0 0
        %486 = vmatprep.subr.bf16.mxu0 0
        %487 = vmatpush1.bf16.msra.mxu0 0
        %488 = vmatprep.subr.bf16.mxu0 0
        %489 = vmatpush1.bf16.msra.mxu0 0
        %490 = vmatprep.subr.bf16.mxu0 0
        %491 = vmatpush1.bf16.msra.mxu0 0
        %492 = vmatprep.mubr.bf16.mxu0 0
        %493 = vmatmul.mubr.bf16.gmra.mrb[0].mxu0 %v407
        %v494 = vpop.f32.mrb[0].mxu0
        %v495 = vadd.f32 0.0, %v494
        %v496 = vpop.f32.mrb[0].mxu0
        %v497 = vpop.f32.mrb[0].mxu0
        %v498 = vpop.f32.mrb[0].mxu0
        %499 = vdwg.mxu0
        %v500 = vlaneseq
        %v501 = vand.u32 %v500, 127
        %v502 = vadd.s32 %v501, 128
        %v503 = vadd.s32 %v501, 256
        %vm504 = vcmp.lt.s32.totalorder %v501, 0
        %v505 = vsub.s32 0, %v501
        %v506 = vsel %vm504, %v505, %v501
        %v507 = vmul.u32.u64.compose %v506, 3817748708
        %v508 = vextract.low.u32 %v507
        %v509 = vextract.high.u32 %v507
        %v510 = vshrl.u32 %v509, 4
        %v511 = vmul.u32 %v510, 18
        %v512 = vsub.s32 %v506, %v511
        %v513 = vsub.s32 0, %v512
        %v514 = vsel %vm504, %v513, %v512
        %vm515 = vcmp.lt.s32.totalorder %v502, 0
        %v516 = vsub.s32 0, %v502
        %v517 = vsel %vm515, %v516, %v502
        %v518 = vmul.u32.u64.compose %v517, 3817748708
        %v519 = vextract.low.u32 %v518
        %v520 = vextract.high.u32 %v518
        %v521 = vshrl.u32 %v520, 4
        %v522 = vmul.u32 %v521, 18
        %v523 = vsub.s32 %v517, %v522
        %v524 = vsub.s32 0, %v523
        %v525 = vsel %vm515, %v524, %v523
        %vm526 = vcmp.lt.s32.totalorder %v503, 0
        %v527 = vsub.s32 0, %v503
        %v528 = vsel %vm526, %v527, %v503
        %v529 = vmul.u32.u64.compose %v528, 3817748708
        %v530 = vextract.low.u32 %v529
        %v531 = vextract.high.u32 %v529
        %v532 = vshrl.u32 %v531, 4
        %v533 = vmul.u32 %v532, 18
        %v534 = vsub.s32 %v528, %v533
        %v535 = vsub.s32 0, %v534
        %v536 = vsel %vm526, %v535, %v534
        %vm537 = vcmp.ne.s32.totalorder %v514, 0
        %vm538 = vcmp.ne.s32.totalorder %v525, 0
        %vm539 = vcmp.ne.s32.totalorder %v536, 0
        %vm540 = vcmp.lt.s32.totalorder %v514, 0
        %vm541 = vcmp.lt.s32.totalorder %v525, 0
        %vm542 = vcmp.lt.s32.totalorder %v536, 0
        %vm543 = vmand %vm540, %vm537
        %vm544 = vmand %vm541, %vm538
        %vm545 = vmand %vm542, %vm539
        %v546 = vadd.s32 %v514, 18
        %v547 = vadd.s32 %v525, 18
        %v548 = vadd.s32 %v536, 18
        %v549 = vsel %vm543, %v546, %v514
        %v550 = vsel %vm544, %v547, %v525
        %v551 = vsel %vm545, %v548, %v536
        %vm552 = vcmp.lt.s32.totalorder %v549, 16
        %vm553 = vcmp.lt.s32.totalorder %v550, 16
        %vm554 = vcmp.lt.s32.totalorder %v551, 16
        %vm555 = vcmp.lt.s32.totalorder %v501, 288
        %vm556 = vcmp.lt.s32.totalorder %v502, 288
        %vm557 = vcmp.lt.s32.totalorder %v503, 288
        %vm558 = vmand %vm552, %vm555
        %vm559 = vmand %vm553, %vm556
        %vm560 = vmand %vm554, %vm557
        %v561 = vsel %vm558, 1.0, 0.0
        %v562 = vsel %vm559, 1.0, 0.0
        %v563 = vsel %vm560, 1.0, 0.0
        %v564 = vmul.f32 %v454, %v561
        %v565 = vmul.f32 %v456, %v562
        %v566 = vmul.f32 %v495, %v563
        %v567 = vadd.f32 %v564, %v565
        %v568 = vadd.f32 %v567, %v566
        %569 = vadd.xlane.f32.xlu0 %v568
        %v570 = vpop.xlane.xlu0 %569
        %v571 = vmul.f32 %v564, %v454
        %v572 = vmul.f32 %v565, %v456
        %v573 = vmul.f32 %v566, %v495
        %v574 = vadd.f32 %v571, %v572
        %v575 = vadd.f32 %v574, %v573
        %576 = vadd.xlane.f32.xlu0 %v575
        %v577 = vpop.xlane.xlu0 %576
        %v578 = vmul.f32 %v570, 0.00390625
        %v579 = vmul.f32 %v577, 0.00390625
        %v580 = vmul.f32 %v578, %v578
        %v581 = vsub.f32 %v579, %v580
        %v582 = vmax.f32 %v581, 0.0
        %v583 = vadd.f32 %v582, 1e-05
        %v584 = vrsqrt.pop %v583
        %v585 = vmul.f32 %v454, %v584
        %v586 = vmul.f32 %v456, %v584
        %v587 = vmul.f32 %v495, %v584
        %v588 = vmul.f32 %v578, %v584
        %v589 = vsub.f32 %v585, %v588
        %v590 = vsub.f32 %v586, %v588
        %v591 = vsub.f32 %v587, %v588
        %v592 = vmax.f32 %v589, 0.0
        %v593 = vmax.f32 %v590, 0.0
        %v594 = vmax.f32 %v591, 0.0
        %595 = vst [vmem:[%s193] sm:$0xff] %v592
        %596 = vst [vmem:[%s193 + $0x8] sm:$0xff] %v593
        %597 = vst [vmem:[%s193 + $0x10] sm:$0xff] %v594
        %s598 = sand.u32 %s94, 1
        %s599 = scalar_lea.sflag [#allocation5], %s598
        %s600 = sand.u32 %s94, 1
        %s601 = smul.addr %s600, 24
        %s602 = scalar_lea.vmem [#allocation8], %s601
        // Predicated region
        $region37: #{tpu_custom_call.1} parent=27 // pred_check
          %p603 = pneg %p104
        $region38: #{tpu_custom_call.1} parent=27 // pred_check_branch
          %605 = sbr.rel (%p603) target = $region40
        $region39: #{tpu_custom_call.1} parent=27 // pred_region
          %s607 = ssub.s32 384, 384
          %608 = vsyncadd %s599, %s607
          %s609 = smul.addr %s25, 3
          %s610 = smul.addr %s24, 3
          %s611 = sadd.s32 %s609, %s610
          %s612 = smul.addr %s611, 128
          %s613 = scalar_lea.hbm %s2, %s612
          %s615 = sshll.u32 %s602, 4
          %s616 = int_to_ptr.vmem [resolvable:$true] %s615
          %618 = dma.vmem_to_hbm [thread:$0]  %s616, 384, %s613, %s599
        $region40: #{tpu_custom_call.1} parent=27 // pred_fallthru
          _
      $region28: #{tpu_custom_call.1} parent=5 // pred_fallthru
        _
      %p619 = scmp.le.s32.totalorder 2, %s15
      // Predicated region
      $region41: #{tpu_custom_call.1} parent=5 // pred_check
        %p620 = pneg %p619
      $region42: #{tpu_custom_call.1} parent=5 // pred_check_branch
        %622 = sbr.rel (%p620) target = $region44
      $region43: #{tpu_custom_call.1} parent=5 // pred_region
        %s623 = ssub.s32 %s15, 2
        // Predicated region
        $region45: #{tpu_custom_call.1} parent=43 // pred_check
          %p624 = pneg %p110
        $region46: #{tpu_custom_call.1} parent=43 // pred_check_branch
          %626 = sbr.rel (%p624) target = $region48
        $region47: #{tpu_custom_call.1} parent=43 // pred_region
          %s627 = sand.u32 %s95, 1
          %s628 = scalar_lea.sflag [#allocation5], %s627
          %s629 = sand.u32 %s95, 1
          %s630 = smul.addr %s629, 24
          %s631 = scalar_lea.vmem [#allocation8], %s630
          %632 = dma.done %s628, 384
        $region48: #{tpu_custom_call.1} parent=43 // pred_fallthru
          _
      $region44: #{tpu_custom_call.1} parent=5 // pred_fallthru
        _
    $region6: #{tpu_custom_call.1} parent=1 // loop_footer
      %s19 = sadd.s32 1, %s15
    $region7: #{tpu_custom_call.1} parent=1 // loop_footer_branch
      %14 = sbr.rel target = $region3
    $region8: #{tpu_custom_call.1} parent=1 // loop_exit
      _
    %633 = vsyncpa [#allocation4], 1
    %s634 = scalar_lea.sflag [#allocation4], 1
    %635 = vsyncpa %s634, 1
    %636 = vsyncpa [#allocation7], 1
    %637 = vsyncpa [#allocation5], 1
    %s638 = scalar_lea.sflag [#allocation5], 1
    %639 = vsyncpa %s638, 1

</llo_original>
